<compile_context>
chip_gen: v6e
topology: v6e:2x2x1
jax: 0.10.0
libtpu: 0.0.40
codegen_flags: <defaults>
</compile_context>

<pallas_src>
import functools

import jax
import jax.numpy as jnp
from jax.experimental import pallas as pl
from jax.experimental.pallas import tpu as pltpu


def _contract_kernel(x_ref, o_ref, tbuf_ref, *, gain, rows, W2):
    """One (batch, channel-tile) grid step.

    x_ref:    (ct*h, w)          input tile, rows flattened as (channel, row)
    o_ref:    (s*s, ct*H2, W2)   output tile, leading dim = (sh, sw) group
    tbuf_ref: (w, ct*H2)         VMEM scratch holding one transposed slab
    """
    s = gain
    for sh in range(s):
        # h de-interleave: rows {cc*h + s*i + sh} over the whole channel tile
        # are the single arithmetic sequence sh, sh+s, ...  -> one strided
        # sublane read (no one-hot matmul, no gather).
        slab = x_ref[pl.ds(sh, rows, stride=s), :]            # (rows, w)
        # Put w on the sublane axis so the sw de-interleave is also a strided
        # sublane read (lane-strided access has no cheap TPU lowering).
        tbuf_ref[...] = jnp.transpose(slab)                   # (w, rows)
        for sw in range(s):
            part = tbuf_ref[pl.ds(sw, W2, stride=s), :]       # (W2, rows)
            # Store straight into this (sh, sw) output channel group,
            # lane-dense along W2, no intermediate casts.
            o_ref[sh * s + sw, :, :] = jnp.transpose(part)    # (rows, W2)


def _pick_channel_tile(b, c, h, w, gain, itemsize, budget_bytes=28 << 20):
    """Largest divisor of c whose full per-step VMEM footprint fits the budget.

    Footprint = 2x input block + 2x output block (double-buffered) + transpose
    scratch + ~1 block of live-value slack.  Partial tiles keep sublane dims
    aligned for the input dtype (8/16/32 rows for 4/2/1-byte elements).
    """
    H2 = h // gain
    sub = {4: 8, 2: 16, 1: 32}.get(itemsize, 8)

    def footprint(ct):
        blk = ct * h * w * itemsize          # input block == total output block
        return 5 * blk + blk // gain         # 2*in + 2*out + slack + scratch

    def aligned(ct):
        return ct == c or (ct * H2) % sub == 0

    cands = [d for d in range(1, c + 1) if c % d == 0 and aligned(d)]
    fitting = [d for d in cands if footprint(d) <= budget_bytes]
    ct = max(fitting) if fitting else min(cands)
    # v7x has two TensorCores: if batch alone can't fill the parallel grid,
    # prefer splitting channels so both cores get work.
    if b * (c // ct) < 2:
        smaller = [d for d in fitting if d < c and b * (c // d) >= 2]
        if smaller:
            ct = max(smaller)
    return ct


def contract_forward(x, gain=2):
    """Pallas TPU implementation of Contract.forward (NCHW in, NCHW out)."""
    b, c, h, w = x.shape
    s = int(gain)
    assert h % s == 0 and w % s == 0, (h, w, s)
    H2, W2 = h // s, w // s
    itemsize = x.dtype.itemsize

    ct = _pick_channel_tile(b, c, h, w, s, itemsize)
    rows = ct * H2
    # TODO(synk): for a single enormous channel (ct == 1 still over budget) an
    # extra H2-row grid axis would be needed; YOLO-range shapes never hit it.

    blk_bytes = ct * h * w * itemsize
    footprint = 5 * blk_bytes + blk_bytes // s
    vmem_limit = int(min(64 << 20, max(32 << 20, 2 * footprint)))

    x3 = x.reshape(b, c * h, w)  # free view: merges leading (c, h) dims only
    kernel = functools.partial(_contract_kernel, gain=s, rows=rows, W2=W2)

    out4 = pl.pallas_call(
        kernel,
        out_shape=jax.ShapeDtypeStruct((b, s * s, c * H2, W2), x.dtype),
        grid=(b, c // ct),
        in_specs=[pl.BlockSpec((None, ct * h, w), lambda bi, ci: (bi, ci, 0))],
        out_specs=pl.BlockSpec((None, s * s, ct * H2, W2),
                               lambda bi, ci: (bi, 0, ci, 0)),
        scratch_shapes=[pltpu.VMEM((w, rows), x.dtype)],
        compiler_params=pltpu.CompilerParams(
            dimension_semantics=("parallel", "parallel"),
            vmem_limit_bytes=vmem_limit),
        cost_estimate=pl.CostEstimate(
            flops=0, transcendentals=0,
            bytes_accessed=2 * b * c * h * w * itemsize),
    )(x3)

    # Free view: splits leading dims only -> final NCHW (b, c*s*s, H2, W2).
    return out4.reshape(b, c * s * s, H2, W2)


def contract_reference(x, gain=2):
    """Pure-JAX reference matching the PyTorch Contract.forward exactly."""
    b, c, h, w = x.shape
    s = gain
    xr = x.reshape(b, c, h // s, s, w // s, s)
    xr = jnp.transpose(xr, (0, 3, 5, 1, 2, 4))
    return xr.reshape(b, c * s * s, h // s, w // s)


if __name__ == "__main__":
    key = jax.random.PRNGKey(0)
    b, c, h, w = 2, 4, 16, 16
    x = jax.random.normal(key, (b, c, h, w), jnp.float32)  # NCHW like PyTorch

    out = jax.block_until_ready(contract_forward(x, gain=2))

    assert out.shape == (b, c * 4, h // 2, w // 2), out.shape
    ref = contract_reference(x, gain=2)
    # Pure data movement -> must be bit-exact.
    assert bool(jnp.array_equal(out, ref)), float(jnp.max(jnp.abs(out - ref)))
    print("KERNEL_OK")
</pallas_src>

<mosaic_0001>
module attributes {stable_mosaic.version = 11 : i64} {
  func.func @_contract_kernel(%arg0: i32, %arg1: i32, %arg2: memref<1x64x16xf32, #tpu.memory_space<vmem>>, %arg3: memref<1x4x32x8xf32, #tpu.memory_space<vmem>>, %arg4: memref<16x32xf32, #tpu.memory_space<vmem>>) attributes {dimension_semantics = [#tpu.dimension_semantics<parallel>, #tpu.dimension_semantics<parallel>], iteration_bounds = array<i64: 2, 1>, scalar_prefetch = 0 : i64, scratch_operands = 1 : i64, tpu.core_type = #tpu.core_type<tc>, window_params = [{transform_indices = @transform_0, window_bounds = array<i64: 1, 64, 16>}, {transform_indices = @transform_1, window_bounds = array<i64: 1, 4, 32, 8>}]} {
    %c0 = arith.constant 0 : index
    %c0_0 = arith.constant 0 : index
    %c0_1 = arith.constant 0 : index
    %0 = tpu.strided_load %arg2[%c0, %c0_0, %c0_1] {strides = array<i32: 1, 2, 1>} : memref<1x64x16xf32, #tpu.memory_space<vmem>>, vector<1x32x16xf32>
    %1 = vector.shape_cast %0 : vector<1x32x16xf32> to vector<32x16xf32>
    %2 = tpu.transpose %1, [1, 0] : vector<32x16xf32> -> vector<16x32xf32>
    %c0_2 = arith.constant 0 : index
    %c0_3 = arith.constant 0 : index
    %3 = vector.load %arg4[%c0_2, %c0_3] : memref<16x32xf32, #tpu.memory_space<vmem>>, vector<16x32xf32>
    tpu.vector_store %arg4[%c0_2, %c0_3], %2 {strides = array<i32>} : memref<16x32xf32, #tpu.memory_space<vmem>>, vector<16x32xf32>,
    %c0_4 = arith.constant 0 : index
    %c0_5 = arith.constant 0 : index
    %4 = tpu.strided_load %arg4[%c0_4, %c0_5] {strides = array<i32: 2, 1>} : memref<16x32xf32, #tpu.memory_space<vmem>>, vector<8x32xf32>
    %5 = tpu.transpose %4, [1, 0] : vector<8x32xf32> -> vector<32x8xf32>
    %c0_6 = arith.constant 0 : index
    %c0_7 = arith.constant 0 : index
    %c0_8 = arith.constant 0 : index
    %c0_9 = arith.constant 0 : index
    %6 = vector.load %arg3[%c0_6, %c0_7, %c0_8, %c0_9] : memref<1x4x32x8xf32, #tpu.memory_space<vmem>>, vector<1x1x32x8xf32>
    %7 = vector.shape_cast %6 : vector<1x1x32x8xf32> to vector<32x8xf32>
    %8 = vector.shape_cast %5 : vector<32x8xf32> to vector<1x1x32x8xf32>
    tpu.vector_store %arg3[%c0_6, %c0_7, %c0_8, %c0_9], %8 {strides = array<i32>} : memref<1x4x32x8xf32, #tpu.memory_space<vmem>>, vector<1x1x32x8xf32>,
    %c1 = arith.constant 1 : index
    %c0_10 = arith.constant 0 : index
    %9 = tpu.strided_load %arg4[%c1, %c0_10] {strides = array<i32: 2, 1>} : memref<16x32xf32, #tpu.memory_space<vmem>>, vector<8x32xf32>
    %10 = tpu.transpose %9, [1, 0] : vector<8x32xf32> -> vector<32x8xf32>
    %c0_11 = arith.constant 0 : index
    %c1_12 = arith.constant 1 : index
    %c0_13 = arith.constant 0 : index
    %c0_14 = arith.constant 0 : index
    %11 = vector.load %arg3[%c0_11, %c1_12, %c0_13, %c0_14] : memref<1x4x32x8xf32, #tpu.memory_space<vmem>>, vector<1x1x32x8xf32>
    %12 = vector.shape_cast %11 : vector<1x1x32x8xf32> to vector<32x8xf32>
    %13 = vector.shape_cast %10 : vector<32x8xf32> to vector<1x1x32x8xf32>
    tpu.vector_store %arg3[%c0_11, %c1_12, %c0_13, %c0_14], %13 {strides = array<i32>} : memref<1x4x32x8xf32, #tpu.memory_space<vmem>>, vector<1x1x32x8xf32>,
    %c0_15 = arith.constant 0 : index
    %c1_16 = arith.constant 1 : index
    %c0_17 = arith.constant 0 : index
    %14 = tpu.strided_load %arg2[%c0_15, %c1_16, %c0_17] {strides = array<i32: 1, 2, 1>} : memref<1x64x16xf32, #tpu.memory_space<vmem>>, vector<1x32x16xf32>
    %15 = vector.shape_cast %14 : vector<1x32x16xf32> to vector<32x16xf32>
    %16 = tpu.transpose %15, [1, 0] : vector<32x16xf32> -> vector<16x32xf32>
    %c0_18 = arith.constant 0 : index
    %c0_19 = arith.constant 0 : index
    %17 = vector.load %arg4[%c0_18, %c0_19] : memref<16x32xf32, #tpu.memory_space<vmem>>, vector<16x32xf32>
    tpu.vector_store %arg4[%c0_18, %c0_19], %16 {strides = array<i32>} : memref<16x32xf32, #tpu.memory_space<vmem>>, vector<16x32xf32>,
    %c0_20 = arith.constant 0 : index
    %c0_21 = arith.constant 0 : index
    %18 = tpu.strided_load %arg4[%c0_20, %c0_21] {strides = array<i32: 2, 1>} : memref<16x32xf32, #tpu.memory_space<vmem>>, vector<8x32xf32>
    %19 = tpu.transpose %18, [1, 0] : vector<8x32xf32> -> vector<32x8xf32>
    %c0_22 = arith.constant 0 : index
    %c2 = arith.constant 2 : index
    %c0_23 = arith.constant 0 : index
    %c0_24 = arith.constant 0 : index
    %20 = vector.load %arg3[%c0_22, %c2, %c0_23, %c0_24] : memref<1x4x32x8xf32, #tpu.memory_space<vmem>>, vector<1x1x32x8xf32>
    %21 = vector.shape_cast %20 : vector<1x1x32x8xf32> to vector<32x8xf32>
    %22 = vector.shape_cast %19 : vector<32x8xf32> to vector<1x1x32x8xf32>
    tpu.vector_store %arg3[%c0_22, %c2, %c0_23, %c0_24], %22 {strides = array<i32>} : memref<1x4x32x8xf32, #tpu.memory_space<vmem>>, vector<1x1x32x8xf32>,
    %c1_25 = arith.constant 1 : index
    %c0_26 = arith.constant 0 : index
    %23 = tpu.strided_load %arg4[%c1_25, %c0_26] {strides = array<i32: 2, 1>} : memref<16x32xf32, #tpu.memory_space<vmem>>, vector<8x32xf32>
    %24 = tpu.transpose %23, [1, 0] : vector<8x32xf32> -> vector<32x8xf32>
    %c0_27 = arith.constant 0 : index
    %c3 = arith.constant 3 : index
    %c0_28 = arith.constant 0 : index
    %c0_29 = arith.constant 0 : index
    %25 = vector.load %arg3[%c0_27, %c3, %c0_28, %c0_29] : memref<1x4x32x8xf32, #tpu.memory_space<vmem>>, vector<1x1x32x8xf32>
    %26 = vector.shape_cast %25 : vector<1x1x32x8xf32> to vector<32x8xf32>
    %27 = vector.shape_cast %24 : vector<32x8xf32> to vector<1x1x32x8xf32>
    tpu.vector_store %arg3[%c0_27, %c3, %c0_28, %c0_29], %27 {strides = array<i32>} : memref<1x4x32x8xf32, #tpu.memory_space<vmem>>, vector<1x1x32x8xf32>,
    return
  }
  func.func @transform_0(%arg0: i32, %arg1: i32) -> (i32, i32, i32) {
    %c0_i32 = arith.constant 0 : i32
    %c0_i32_0 = arith.constant 0 : i32
    return %arg0, %arg1, %c0_i32 : i32, i32, i32
  }
  func.func @transform_1(%arg0: i32, %arg1: i32) -> (i32, i32, i32, i32) {
    %c0_i32 = arith.constant 0 : i32
    %c0_i32_0 = arith.constant 0 : i32
    %c0_i32_1 = arith.constant 0 : i32
    return %arg0, %c0_i32, %arg1, %c0_i32_0 : i32, i32, i32, i32
  }
}

</mosaic_0001>

<llo_original>
// kernel: tpu_custom_call.1
$region0: #{tpu_custom_call.1}
  #allocation0 [shape = 'u32[]', space=smem, size = 0x4, offset = 0x4, fixed_abs, tag = 'smem constant byte address 0x4 - core index']
  #allocation1 [shape = 'u32[144,128]{1,0:T(1,128)}', space=vmem, size = 0x12000, scoped, tag = 'internal scratch']
  #allocation2 [shape = 'f32[16,32]{1,0:T(8,128)}', space=vmem, size = 0x2000, scoped, tag = 'scratch operand']
  %s0 = inlined_call_operand.vmem [shape: f32[2,64,16], index: 0, kind: input, shape index: {}]
  %s1 = inlined_call_operand.vmem [shape: f32[2,4,32,8], index: 1, kind: output, shape index: {}]
  %s2 = sld [smem:[#allocation0]]
  $region37: #{tpu_custom_call.1} parent=0
    _
  %s4 = ssub.s32 1, %s2
  %s5 = scalar_select 0, %s4, %s2
  loop: start=0, step=1, limit=4
  $region2: #{tpu_custom_call.1} parent=0 // loop_pre_header
    _
  $region3: #{tpu_custom_call.1} parent=0 // loop_header
    %s7 = sphi 0, %s11
    %p8 = scmp.ge.s32.totalorder %s7, 4
    %s14 = sphi 0, %s26
    %s15 = sphi 0, %s22
    %s16 = sphi 0, %s14
    %s17 = sphi 0, %s15
    %s18 = sphi 0, %s16
    %s19 = sphi 0, %s17
    %s31 = sphi 0, %s33
    %s34 = sphi 0, %s31
    %s35 = sphi 0, %s34
    %s51 = sphi 0, %s35
    %s59 = sphi 0, %s61
    %s62 = sphi 0, %s59
    %s63 = sphi 0, %s62
    %s79 = sphi 0, %s63
  $region4: #{tpu_custom_call.1} parent=0 // loop_header_branch
    %10 = sbr.rel (%p8) target = $region8
  $region5: #{tpu_custom_call.1} parent=0 // loop_body
    %s12 = ssub.s32 %s7, 1
    %s13 = ssub.s32 %s7, 2
    %s20 = sadd.s32 1, %s15
    %p21 = scmp.ge.s32.totalorder %s20, 1
    %s22 = scalar_select %p21, 0, %s20
    %s23 = sadd.s32 1, %s14
    %s24 = scalar_select %p21, %s23, %s14
    %p25 = scmp.ge.s32.totalorder %s24, 2
    %s26 = scalar_select %p25, 0, %s24
    %s27 = ssub.s32 %s14, %s26
    %s28 = ssub.s32 %s15, %s22
    %s29 = sor.u32 %s27, %s28
    %p30 = scmp.eq.s32.totalorder %s29, 0
    %s32 = sadd.s32 %s31, 1
    %s33 = scalar_select %p30, %s31, %s32
    %p36 = pneg %p30
    %p37 = scmp.eq.s32.totalorder %s7, 1
    %p38 = por %p36, %p37
    %p39 = scmp.ne.s32.totalorder %s31, %s34
    %p40 = scmp.eq.s32.totalorder %s7, 0
    %p41 = por %p39, %p40
    %p42 = scmp.ne.s32.totalorder %s31, %s34
    %p43 = scmp.eq.s32.totalorder %s12, 1
    %p44 = por %p42, %p43
    %p45 = scmp.ne.s32.totalorder %s34, %s35
    %p46 = scmp.eq.s32.totalorder %s12, 0
    %p47 = por %p45, %p46
    %p48 = scmp.ne.s32.totalorder %s34, %s35
    %p49 = scmp.eq.s32.totalorder %s13, 1
    %p50 = por %p48, %p49
    %p52 = scmp.ne.s32.totalorder %s35, %s51
    %p53 = scmp.eq.s32.totalorder %s13, 0
    %p54 = por %p52, %p53
    %s55 = ssub.s32 %s14, %s26
    %s56 = ssub.s32 %s15, %s22
    %s57 = sor.u32 %s55, %s56
    %p58 = scmp.eq.s32.totalorder %s57, 0
    %s60 = sadd.s32 %s59, 1
    %s61 = scalar_select %p58, %s59, %s60
    %p64 = pneg %p58
    %p65 = scmp.eq.s32.totalorder %s7, 1
    %p66 = por %p64, %p65
    %p67 = scmp.ne.s32.totalorder %s59, %s62
    %p68 = scmp.eq.s32.totalorder %s7, 0
    %p69 = por %p67, %p68
    %p70 = scmp.ne.s32.totalorder %s59, %s62
    %p71 = scmp.eq.s32.totalorder %s12, 1
    %p72 = por %p70, %p71
    %p73 = scmp.ne.s32.totalorder %s62, %s63
    %p74 = scmp.eq.s32.totalorder %s12, 0
    %p75 = por %p73, %p74
    %p76 = scmp.ne.s32.totalorder %s62, %s63
    %p77 = scmp.eq.s32.totalorder %s13, 1
    %p78 = por %p76, %p77
    %p80 = scmp.ne.s32.totalorder %s63, %s79
    %p81 = scmp.eq.s32.totalorder %s13, 0
    %p82 = por %p80, %p81
    %p83 = scmp.le.s32.totalorder 1, %s7
    %p84 = scmp.lt.s32.totalorder %s7, 3
    %p85 = pnand %p83, %p84
    %p86 = pneg %p85
    // Predicated region
    $region9: #{tpu_custom_call.1} parent=5 // pred_check
      _
    $region10: #{tpu_custom_call.1} parent=5 // pred_check_branch
      %88 = sbr.rel (%p85) target = $region12
    $region11: #{tpu_custom_call.1} parent=5 // pred_region
      %s89 = ssub.s32 %s7, 1
    $region12: #{tpu_custom_call.1} parent=5 // pred_fallthru
      _
    %p90 = scmp.lt.s32.totalorder %s7, 2
    // Predicated region
    $region13: #{tpu_custom_call.1} parent=5 // pred_check
      %p91 = pneg %p90
    $region14: #{tpu_custom_call.1} parent=5 // pred_check_branch
      %93 = sbr.rel (%p91) target = $region16
    $region15: #{tpu_custom_call.1} parent=5 // pred_region
      // Predicated region
      $region17: #{tpu_custom_call.1} parent=15 // pred_check
        %p94 = pneg %p41
      $region18: #{tpu_custom_call.1} parent=15 // pred_check_branch
        %96 = sbr.rel (%p94) target = $region20
      $region19: #{tpu_custom_call.1} parent=15 // pred_region
        %s97 = smul.u32 8, %s15
        %p98 = scmp.lt.s32.totalorder %s14, 1
        %s99 = scalar_select %p98, %s14, 1
        %p100 = scmp.lt.s32.totalorder %s97, 7
        %s101 = scalar_select %p100, %s97, 7
        %s102 = smul.addr %s99, 8
        %s103 = sadd.s32 %s101, %s102
        %s104 = smul.addr %s103, 8
        %s105 = scalar_lea.vmem %s0, %s104
        %s106 = smul.u32 8, %s15
      $region20: #{tpu_custom_call.1} parent=15 // pred_fallthru
        _
    $region16: #{tpu_custom_call.1} parent=5 // pred_fallthru
      _
    %p107 = scmp.le.s32.totalorder 1, %s7
    %p108 = scmp.lt.s32.totalorder %s7, 3
    %p109 = pnand %p107, %p108
    %p110 = pneg %p109
    // Predicated region
    $region21: #{tpu_custom_call.1} parent=5 // pred_check
      _
    $region22: #{tpu_custom_call.1} parent=5 // pred_check_branch
      %112 = sbr.rel (%p109) target = $region24
    $region23: #{tpu_custom_call.1} parent=5 // pred_region
      %s113 = ssub.s32 %s7, 1
      %s114 = smul.u32 8, %s17
      %p115 = scmp.lt.s32.totalorder %s16, 1
      %s116 = scalar_select %p115, %s16, 1
      %p117 = scmp.lt.s32.totalorder %s114, 7
      %s118 = scalar_select %p117, %s114, 7
      %s119 = smul.addr %s116, 8
      %s120 = sadd.s32 %s118, %s119
      %s121 = smul.addr %s120, 8
      %s122 = scalar_lea.vmem %s0, %s121
      %p123 = pneg %p47
      %p124 = pneg %p44
      %p125 = pneg %p75
      %p126 = pneg %p72
      %s127 = smul.u32 4, %s17
      %p128 = scmp.lt.s32.totalorder %s16, 1
      %s129 = scalar_select %p128, %s16, 1
      %p130 = scmp.lt.s32.totalorder %s127, 3
      %s131 = scalar_select %p130, %s127, 3
      %s132 = smul.addr %s129, 16
      %s133 = sadd.s32 %s131, %s132
      %s134 = smul.addr %s133, 8
      %s135 = scalar_lea.vmem %s1, %s134
      %s136 = smul.u32 8, %s17
      %p137 = scmp.lt.s32.totalorder %s16, 1
      %s138 = scalar_select %p137, %s16, 1
      %p139 = scmp.lt.s32.totalorder %s136, 7
      %s140 = scalar_select %p139, %s136, 7
      %s141 = smul.addr %s138, 8
      %s142 = sadd.s32 %s140, %s141
      %s143 = smul.addr %s142, 8
      %s144 = scalar_lea.vmem %s0, %s143
      %s145 = smul.u32 8, %s17
      %s146 = smul.u32 4, %s17
      %p147 = scmp.lt.s32.totalorder %s16, 1
      %s148 = scalar_select %p147, %s16, 1
      %p149 = scmp.lt.s32.totalorder %s146, 3
      %s150 = scalar_select %p149, %s146, 3
      %s151 = smul.addr %s148, 16
      %s152 = sadd.s32 %s150, %s151
      %s153 = smul.addr %s152, 8
      %s154 = scalar_lea.vmem %s1, %s153
      %s155 = smul.u32 4, %s17
      %v156 = vld [vmem:[%s144] ss:$2 sm:$0xff]
      %s157 = scalar_lea.vmem %s144, 16
      %v158 = vld [vmem:[%s157] ss:$2 sm:$0xff]
      %s159 = scalar_lea.vmem %s144, 32
      %v160 = vld [vmem:[%s159] ss:$2 sm:$0xff]
      %s161 = scalar_lea.vmem %s144, 48
      %v162 = vld [vmem:[%s161] ss:$2 sm:$0xff]
      %163 = vxpose.xlu0.b32.start [1/16] %v156, 128
      %164 = vxpose.xlu0.b32.cont [2/16] %v158, 128
      %165 = vxpose.xlu0.b32.cont [3/16] %v160, 128
      %166 = vxpose.xlu0.b32.cont [4/16] %v162, 128
      %167 = vxpose.xlu0.b32.cont [5/16] 0.0, 128
      %168 = vxpose.xlu0.b32.cont [6/16] 0.0, 128
      %169 = vxpose.xlu0.b32.cont [7/16] 0.0, 128
      %170 = vxpose.xlu0.b32.cont [8/16] 0.0, 128
      %171 = vxpose.xlu0.b32.cont [9/16] 0.0, 128
      %172 = vxpose.xlu0.b32.cont [10/16] 0.0, 128
      %173 = vxpose.xlu0.b32.cont [11/16] 0.0, 128
      %174 = vxpose.xlu0.b32.cont [12/16] 0.0, 128
      %175 = vxpose.xlu0.b32.cont [13/16] 0.0, 128
      %176 = vxpose.xlu0.b32.cont [14/16] 0.0, 128
      %177 = vxpose.xlu0.b32.cont [15/16] 0.0, 128
      %178 = vxpose.xlu0.b32.end [16/16] 0.0, 128
      %v179 = vpop.trf.xlu0
      %v180 = vpop.trf.xlu0
      %v181 = vpop.trf.xlu0
      %v182 = vpop.trf.xlu0
      %v183 = vpop.trf.xlu0
      %v184 = vpop.trf.xlu0
      %v185 = vpop.trf.xlu0
      %v186 = vpop.trf.xlu0
      %v187 = vpop.trf.xlu0
      %v188 = vpop.trf.xlu0
      %v189 = vpop.trf.xlu0
      %v190 = vpop.trf.xlu0
      %v191 = vpop.trf.xlu0
      %v192 = vpop.trf.xlu0
      %v193 = vpop.trf.xlu0
      %v194 = vpop.trf.xlu0
      %vm195 = vcmask 261120
      %196 = vst.msk [vmem:[#allocation2] sm:$0xff] %vm195, %v179
      %197 = vst.msk [vmem:[#allocation2 + $0x8] sm:$0xff] %vm195, %v180
      %v198 = vld [vmem:[#allocation2] ss:$2 sm:$0xff]
      %199 = vxpose.xlu0.b32.start [1/16] %v198, 128
      %200 = vxpose.xlu0.b32.cont [2/16] 0.0, 128
      %201 = vxpose.xlu0.b32.cont [3/16] 0.0, 128
      %202 = vxpose.xlu0.b32.cont [4/16] 0.0, 128
      %203 = vxpose.xlu0.b32.cont [5/16] 0.0, 128
      %204 = vxpose.xlu0.b32.cont [6/16] 0.0, 128
      %205 = vxpose.xlu0.b32.cont [7/16] 0.0, 128
      %206 = vxpose.xlu0.b32.cont [8/16] 0.0, 128
      %207 = vxpose.xlu0.b32.cont [9/16] 0.0, 128
      %208 = vxpose.xlu0.b32.cont [10/16] 0.0, 128
      %209 = vxpose.xlu0.b32.cont [11/16] 0.0, 128
      %210 = vxpose.xlu0.b32.cont [12/16] 0.0, 128
      %211 = vxpose.xlu0.b32.cont [13/16] 0.0, 128
      %212 = vxpose.xlu0.b32.cont [14/16] 0.0, 128
      %213 = vxpose.xlu0.b32.cont [15/16] 0.0, 128
      %214 = vxpose.xlu0.b32.end [16/16] 0.0, 128
      %v215 = vpop.trf.xlu0
      %v216 = vpop.trf.xlu0
      %v217 = vpop.trf.xlu0
      %v218 = vpop.trf.xlu0
      %v219 = vpop.trf.xlu0
      %v220 = vpop.trf.xlu0
      %v221 = vpop.trf.xlu0
      %v222 = vpop.trf.xlu0
      %v223 = vpop.trf.xlu0
      %v224 = vpop.trf.xlu0
      %v225 = vpop.trf.xlu0
      %v226 = vpop.trf.xlu0
      %v227 = vpop.trf.xlu0
      %v228 = vpop.trf.xlu0
      %v229 = vpop.trf.xlu0
      %v230 = vpop.trf.xlu0
      %vm231 = vcmask 64512
      %232 = vst.msk [vmem:[%s154] sm:$0xff] %vm231, %v215
      %233 = vst.msk [vmem:[%s154 + $0x8] sm:$0xff] %vm231, %v216
      %234 = vst.msk [vmem:[%s154 + $0x10] sm:$0xff] %vm231, %v217
      %235 = vst.msk [vmem:[%s154 + $0x18] sm:$0xff] %vm231, %v218
      %s236 = scalar_lea.vmem [#allocation2], 1
      %v237 = vld [vmem:[%s236] ss:$2 sm:$0xff]
      %238 = vxpose.xlu0.b32.start [1/16] %v237, 128
      %239 = vxpose.xlu0.b32.cont [2/16] 0.0, 128
      %240 = vxpose.xlu0.b32.cont [3/16] 0.0, 128
      %241 = vxpose.xlu0.b32.cont [4/16] 0.0, 128
      %242 = vxpose.xlu0.b32.cont [5/16] 0.0, 128
      %243 = vxpose.xlu0.b32.cont [6/16] 0.0, 128
      %244 = vxpose.xlu0.b32.cont [7/16] 0.0, 128
      %245 = vxpose.xlu0.b32.cont [8/16] 0.0, 128
      %246 = vxpose.xlu0.b32.cont [9/16] 0.0, 128
      %247 = vxpose.xlu0.b32.cont [10/16] 0.0, 128
      %248 = vxpose.xlu0.b32.cont [11/16] 0.0, 128
      %249 = vxpose.xlu0.b32.cont [12/16] 0.0, 128
      %250 = vxpose.xlu0.b32.cont [13/16] 0.0, 128
      %251 = vxpose.xlu0.b32.cont [14/16] 0.0, 128
      %252 = vxpose.xlu0.b32.cont [15/16] 0.0, 128
      %253 = vxpose.xlu0.b32.end [16/16] 0.0, 128
      %v254 = vpop.trf.xlu0
      %v255 = vpop.trf.xlu0
      %v256 = vpop.trf.xlu0
      %v257 = vpop.trf.xlu0
      %v258 = vpop.trf.xlu0
      %v259 = vpop.trf.xlu0
      %v260 = vpop.trf.xlu0
      %v261 = vpop.trf.xlu0
      %v262 = vpop.trf.xlu0
      %v263 = vpop.trf.xlu0
      %v264 = vpop.trf.xlu0
      %v265 = vpop.trf.xlu0
      %v266 = vpop.trf.xlu0
      %v267 = vpop.trf.xlu0
      %v268 = vpop.trf.xlu0
      %v269 = vpop.trf.xlu0
      %s270 = scalar_lea.vmem %s154, 32
      %271 = vst.msk [vmem:[%s270] sm:$0xff] %vm231, %v254
      %272 = vst.msk [vmem:[%s270 + $0x8] sm:$0xff] %vm231, %v255
      %273 = vst.msk [vmem:[%s270 + $0x10] sm:$0xff] %vm231, %v256
      %274 = vst.msk [vmem:[%s270 + $0x18] sm:$0xff] %vm231, %v257
      %s275 = scalar_lea.vmem %s144, 1
      %v276 = vld [vmem:[%s275] ss:$2 sm:$0xff]
      %s277 = scalar_lea.vmem %s144, 17
      %v278 = vld [vmem:[%s277] ss:$2 sm:$0xff]
      %s279 = scalar_lea.vmem %s144, 33
      %v280 = vld [vmem:[%s279] ss:$2 sm:$0xff]
      %s281 = scalar_lea.vmem %s144, 49
      %v282 = vld [vmem:[%s281] ss:$2 sm:$0xff]
      %283 = vxpose.xlu0.b32.start [1/16] %v276, 128
      %284 = vxpose.xlu0.b32.cont [2/16] %v278, 128
      %285 = vxpose.xlu0.b32.cont [3/16] %v280, 128
      %286 = vxpose.xlu0.b32.cont [4/16] %v282, 128
      %287 = vxpose.xlu0.b32.cont [5/16] 0.0, 128
      %288 = vxpose.xlu0.b32.cont [6/16] 0.0, 128
      %289 = vxpose.xlu0.b32.cont [7/16] 0.0, 128
      %290 = vxpose.xlu0.b32.cont [8/16] 0.0, 128
      %291 = vxpose.xlu0.b32.cont [9/16] 0.0, 128
      %292 = vxpose.xlu0.b32.cont [10/16] 0.0, 128
      %293 = vxpose.xlu0.b32.cont [11/16] 0.0, 128
      %294 = vxpose.xlu0.b32.cont [12/16] 0.0, 128
      %295 = vxpose.xlu0.b32.cont [13/16] 0.0, 128
      %296 = vxpose.xlu0.b32.cont [14/16] 0.0, 128
      %297 = vxpose.xlu0.b32.cont [15/16] 0.0, 128
      %298 = vxpose.xlu0.b32.end [16/16] 0.0, 128
      %v299 = vpop.trf.xlu0
      %v300 = vpop.trf.xlu0
      %v301 = vpop.trf.xlu0
      %v302 = vpop.trf.xlu0
      %v303 = vpop.trf.xlu0
      %v304 = vpop.trf.xlu0
      %v305 = vpop.trf.xlu0
      %v306 = vpop.trf.xlu0
      %v307 = vpop.trf.xlu0
      %v308 = vpop.trf.xlu0
      %v309 = vpop.trf.xlu0
      %v310 = vpop.trf.xlu0
      %v311 = vpop.trf.xlu0
      %v312 = vpop.trf.xlu0
      %v313 = vpop.trf.xlu0
      %v314 = vpop.trf.xlu0
      %315 = vst.msk [vmem:[#allocation2] sm:$0xff] %vm195, %v299
      %316 = vst.msk [vmem:[#allocation2 + $0x8] sm:$0xff] %vm195, %v300
      %v317 = vld [vmem:[#allocation2] ss:$2 sm:$0xff]
      %318 = vxpose.xlu0.b32.start [1/16] %v317, 128
      %319 = vxpose.xlu0.b32.cont [2/16] 0.0, 128
      %320 = vxpose.xlu0.b32.cont [3/16] 0.0, 128
      %321 = vxpose.xlu0.b32.cont [4/16] 0.0, 128
      %322 = vxpose.xlu0.b32.cont [5/16] 0.0, 128
      %323 = vxpose.xlu0.b32.cont [6/16] 0.0, 128
      %324 = vxpose.xlu0.b32.cont [7/16] 0.0, 128
      %325 = vxpose.xlu0.b32.cont [8/16] 0.0, 128
      %326 = vxpose.xlu0.b32.cont [9/16] 0.0, 128
      %327 = vxpose.xlu0.b32.cont [10/16] 0.0, 128
      %328 = vxpose.xlu0.b32.cont [11/16] 0.0, 128
      %329 = vxpose.xlu0.b32.cont [12/16] 0.0, 128
      %330 = vxpose.xlu0.b32.cont [13/16] 0.0, 128
      %331 = vxpose.xlu0.b32.cont [14/16] 0.0, 128
      %332 = vxpose.xlu0.b32.cont [15/16] 0.0, 128
      %333 = vxpose.xlu0.b32.end [16/16] 0.0, 128
      %v334 = vpop.trf.xlu0
      %v335 = vpop.trf.xlu0
      %v336 = vpop.trf.xlu0
      %v337 = vpop.trf.xlu0
      %v338 = vpop.trf.xlu0
      %v339 = vpop.trf.xlu0
      %v340 = vpop.trf.xlu0
      %v341 = vpop.trf.xlu0
      %v342 = vpop.trf.xlu0
      %v343 = vpop.trf.xlu0
      %v344 = vpop.trf.xlu0
      %v345 = vpop.trf.xlu0
      %v346 = vpop.trf.xlu0
      %v347 = vpop.trf.xlu0
      %v348 = vpop.trf.xlu0
      %v349 = vpop.trf.xlu0
      %s350 = scalar_lea.vmem %s154, 64
      %351 = vst.msk [vmem:[%s350] sm:$0xff] %vm231, %v334
      %352 = vst.msk [vmem:[%s350 + $0x8] sm:$0xff] %vm231, %v335
      %353 = vst.msk [vmem:[%s350 + $0x10] sm:$0xff] %vm231, %v336
      %354 = vst.msk [vmem:[%s350 + $0x18] sm:$0xff] %vm231, %v337
      %v355 = vld [vmem:[%s236] ss:$2 sm:$0xff]
      %356 = vxpose.xlu0.b32.start [1/16] %v355, 128
      %357 = vxpose.xlu0.b32.cont [2/16] 0.0, 128
      %358 = vxpose.xlu0.b32.cont [3/16] 0.0, 128
      %359 = vxpose.xlu0.b32.cont [4/16] 0.0, 128
      %360 = vxpose.xlu0.b32.cont [5/16] 0.0, 128
      %361 = vxpose.xlu0.b32.cont [6/16] 0.0, 128
      %362 = vxpose.xlu0.b32.cont [7/16] 0.0, 128
      %363 = vxpose.xlu0.b32.cont [8/16] 0.0, 128
      %364 = vxpose.xlu0.b32.cont [9/16] 0.0, 128
      %365 = vxpose.xlu0.b32.cont [10/16] 0.0, 128
      %366 = vxpose.xlu0.b32.cont [11/16] 0.0, 128
      %367 = vxpose.xlu0.b32.cont [12/16] 0.0, 128
      %368 = vxpose.xlu0.b32.cont [13/16] 0.0, 128
      %369 = vxpose.xlu0.b32.cont [14/16] 0.0, 128
      %370 = vxpose.xlu0.b32.cont [15/16] 0.0, 128
      %371 = vxpose.xlu0.b32.end [16/16] 0.0, 128
      %v372 = vpop.trf.xlu0
      %v373 = vpop.trf.xlu0
      %v374 = vpop.trf.xlu0
      %v375 = vpop.trf.xlu0
      %v376 = vpop.trf.xlu0
      %v377 = vpop.trf.xlu0
      %v378 = vpop.trf.xlu0
      %v379 = vpop.trf.xlu0
      %v380 = vpop.trf.xlu0
      %v381 = vpop.trf.xlu0
      %v382 = vpop.trf.xlu0
      %v383 = vpop.trf.xlu0
      %v384 = vpop.trf.xlu0
      %v385 = vpop.trf.xlu0
      %v386 = vpop.trf.xlu0
      %v387 = vpop.trf.xlu0
      %s388 = scalar_lea.vmem %s154, 96
      %389 = vst.msk [vmem:[%s388] sm:$0xff] %vm231, %v372
      %390 = vst.msk [vmem:[%s388 + $0x8] sm:$0xff] %vm231, %v373
      %391 = vst.msk [vmem:[%s388 + $0x10] sm:$0xff] %vm231, %v374
      %392 = vst.msk [vmem:[%s388 + $0x18] sm:$0xff] %vm231, %v375
      %s393 = smul.u32 4, %s17
      %p394 = scmp.lt.s32.totalorder %s16, 1
      %s395 = scalar_select %p394, %s16, 1
      %p396 = scmp.lt.s32.totalorder %s393, 3
      %s397 = scalar_select %p396, %s393, 3
      %s398 = smul.addr %s395, 16
      %s399 = sadd.s32 %s397, %s398
      %s400 = smul.addr %s399, 8
      %s401 = scalar_lea.vmem %s1, %s400
      // Predicated region
      $region25: #{tpu_custom_call.1} parent=23 // pred_check
        %p402 = pneg %p72
      $region26: #{tpu_custom_call.1} parent=23 // pred_check_branch
        %404 = sbr.rel (%p402) target = $region28
      $region27: #{tpu_custom_call.1} parent=23 // pred_region
        %s405 = smul.u32 4, %s17
      $region28: #{tpu_custom_call.1} parent=23 // pred_fallthru
        _
    $region24: #{tpu_custom_call.1} parent=5 // pred_fallthru
      _
    %p406 = scmp.le.s32.totalorder 2, %s7
    // Predicated region
    $region29: #{tpu_custom_call.1} parent=5 // pred_check
      %p407 = pneg %p406
    $region30: #{tpu_custom_call.1} parent=5 // pred_check_branch
      %409 = sbr.rel (%p407) target = $region32
    $region31: #{tpu_custom_call.1} parent=5 // pred_region
      %s410 = ssub.s32 %s7, 2
      // Predicated region
      $region33: #{tpu_custom_call.1} parent=31 // pred_check
        %p411 = pneg %p78
      $region34: #{tpu_custom_call.1} parent=31 // pred_check_branch
        %413 = sbr.rel (%p411) target = $region36
      $region35: #{tpu_custom_call.1} parent=31 // pred_region
        %s414 = smul.u32 4, %s19
        %p415 = scmp.lt.s32.totalorder %s18, 1
        %s416 = scalar_select %p415, %s18, 1
        %p417 = scmp.lt.s32.totalorder %s414, 3
        %s418 = scalar_select %p417, %s414, 3
        %s419 = smul.addr %s416, 16
        %s420 = sadd.s32 %s418, %s419
        %s421 = smul.addr %s420, 8
        %s422 = scalar_lea.vmem %s1, %s421
      $region36: #{tpu_custom_call.1} parent=31 // pred_fallthru
        _
    $region32: #{tpu_custom_call.1} parent=5 // pred_fallthru
      _
  $region6: #{tpu_custom_call.1} parent=0 // loop_footer
    %s11 = sadd.s32 1, %s7
  $region7: #{tpu_custom_call.1} parent=0 // loop_footer_branch
    %6 = sbr.rel target = $region3
  $region8: #{tpu_custom_call.1} parent=0 // loop_exit
    _

</llo_original>
